<compile_context>
chip_gen: v6e
topology: v6e:2x2x1
jax: 0.10.0
libtpu: 0.0.40
codegen_flags: <defaults>
</compile_context>

<pallas_src>
import functools
from typing import NamedTuple

import jax
import jax.numpy as jnp
from jax import lax
from jax.experimental import pallas as pl
from jax.experimental.pallas import tpu as pltpu

_INV_SQRT2 = 0.7071067811865476


def _gelu_exact(x):
    # nn.GELU() default is the exact erf-based GELU.
    return 0.5 * x * (1.0 + lax.erf(x * _INV_SQRT2))


def _round_up(x, m):
    return ((x + m - 1) // m) * m


def _vmem_capacity_bytes():
    try:
        info = pltpu.get_tpu_info()
        cap = getattr(info, "vmem_capacity_bytes", None)
        if cap:
            return int(cap)
    except Exception:
        pass
    return 128 * 1024 * 1024


def _tile_defaults():
    """(vmem_limit_bytes, tm, tk) tuned per TPU generation."""
    cap = _vmem_capacity_bytes()
    if cap <= 64 * 1024 * 1024:
        # v7x-class TensorCore: 64 MiB physical VMEM -> smaller tiles, leave
        # headroom for compiler internal scratch / semaphores.
        return min(cap * 3 // 4, 48 * 1024 * 1024), 512, 512
    # v5e / v6e: 128 MiB physical VMEM; big token tile clears the HBM ridge.
    return min(cap * 3 // 4, 96 * 1024 * 1024), 768, 1024


# ---------------------------------------------------------------------------
# Kernels
# ---------------------------------------------------------------------------
def _ffn_step(x_ref, w1_ref, b1_ref, w2_ref, b2_ref, acc_ref):
    # x_ref:  (tm, d_pad)      token tile (compute dtype, revisited across k)
    # w1_ref: (d_pad, tk)      column slab of W1^T (compute dtype)
    # b1_ref: (1, tk)          f32
    # w2_ref: (tk, d_pad)      row slab of W2^T (compute dtype)
    # b2_ref: (1, d_pad)       f32
    # acc_ref:(tm, d_pad) f32  accumulator (output block itself when f32 out)
    k = pl.program_id(1)

    @pl.when(k == 0)
    def _init():
        # Fold the second bias into the accumulator init.
        acc_ref[...] = jnp.broadcast_to(
            b2_ref[...].astype(acc_ref.dtype), acc_ref.shape)

    # h_chunk = GELU(x @ W1^T[:, k-tile] + b1[k-tile])   (f32 accumulation)
    h = jnp.dot(x_ref[...], w1_ref[...], preferred_element_type=jnp.float32)
    h = _gelu_exact(h + b1_ref[...])
    # acc += h_chunk @ W2^T[k-tile, :]
    acc_ref[...] += jnp.dot(h.astype(w2_ref.dtype), w2_ref[...],
                            preferred_element_type=jnp.float32)


def ffn_kernel_out_is_acc(x_ref, w1_ref, b1_ref, w2_ref, b2_ref, o_ref):
    # f32 output: accumulate directly into the resident output block.
    _ffn_step(x_ref, w1_ref, b1_ref, w2_ref, b2_ref, o_ref)


def ffn_kernel_with_scratch(x_ref, w1_ref, b1_ref, w2_ref, b2_ref, o_ref,
                            acc_ref):
    # Non-f32 output: keep an f32 scratch accumulator, cast on the last step.
    _ffn_step(x_ref, w1_ref, b1_ref, w2_ref, b2_ref, acc_ref)

    @pl.when(pl.program_id(1) == pl.num_programs(1) - 1)
    def _finalize():
        o_ref[...] = acc_ref[...].astype(o_ref.dtype)


# ---------------------------------------------------------------------------
# Parameter preparation (done once, outside the per-call hot path)
# ---------------------------------------------------------------------------
class FFNParams(NamedTuple):
    w1_t: jax.Array   # (d_pad, inter_pad)  padded W1^T, compute dtype
    b1: jax.Array     # (1, inter_pad)      f32
    w2_t: jax.Array   # (inter_pad, d_pad)  padded W2^T, compute dtype
    b2: jax.Array     # (1, d_pad)          f32


def prepare_ffn_params(w1, b1, w2, b2, *, compute_dtype=jnp.bfloat16, tk=None,
                       d_align=256):
    """Transpose / zero-pad / cast the PyTorch-layout weights once.

    w1: (intermediate_dim, model_dim)   nn.Linear layout (out, in)
    b1: (intermediate_dim,)
    w2: (model_dim, intermediate_dim)
    b2: (model_dim,)
    """
    inter, model_dim = w1.shape
    if tk is None:
        tk = _tile_defaults()[2]

    d_pad = _round_up(model_dim, d_align)
    tk_eff = min(tk, _round_up(inter, d_align))
    inter_pad = _round_up(inter, tk_eff)

    # Zero padding is numerically exact: padded intermediate columns have
    # b1 = 0 so GELU(0) = 0 and contribute nothing; padded model-dim columns
    # are sliced off after the kernel.
    w1_t = jnp.zeros((d_pad, inter_pad), compute_dtype).at[
        :model_dim, :inter].set(w1.T.astype(compute_dtype))
    w2_t = jnp.zeros((inter_pad, d_pad), compute_dtype).at[
        :inter, :model_dim].set(w2.T.astype(compute_dtype))
    b1p = jnp.zeros((1, inter_pad), jnp.float32).at[0, :inter].set(
        b1.astype(jnp.float32))
    b2p = jnp.zeros((1, d_pad), jnp.float32).at[0, :model_dim].set(
        b2.astype(jnp.float32))
    return FFNParams(w1_t, b1p, w2_t, b2p)


# ---------------------------------------------------------------------------
# Forward
# ---------------------------------------------------------------------------
def feed_forward(x, params, *, tm=None, tk=None, vmem_limit_bytes=None):
    """FFN forward: linear1 -> GELU -> linear2 over the last dim of x."""
    orig_shape = x.shape
    model_dim = orig_shape[-1]
    x2 = x.reshape(-1, model_dim)
    M = x2.shape[0]

    w1_t, b1p, w2_t, b2p = params
    d_pad, inter_pad = w1_t.shape
    compute_dtype = w1_t.dtype
    out_dtype = x.dtype

    dflt_vmem, dflt_tm, dflt_tk = _tile_defaults()
    tm = dflt_tm if tm is None else tm
    tk = dflt_tk if tk is None else tk
    vmem_limit_bytes = dflt_vmem if vmem_limit_bytes is None else vmem_limit_bytes

    # --- Intermediate (reduction) tile: must evenly divide inter_pad. ---
    tk_eff = min(tk, inter_pad)
    while inter_pad % tk_eff:
        tk_eff -= 128   # inter_pad is a multiple of 128, loop terminates.

    # --- Token tile: sublane-aligned for the compute dtype. ---
    sub = 16 if jnp.dtype(compute_dtype).itemsize < 4 else 8
    m_min = _round_up(M, sub)
    tm_eff = min(tm, m_min)
    # Give v7x's two TensorCores at least 2 "parallel" token tiles when M is
    # large enough to split (harmless on single-TC v5e/v6e).
    if tm_eff == m_min and m_min >= 256:
        tm_eff = _round_up((m_min + 1) // 2, sub)
    m_pad = _round_up(M, tm_eff)

    # Per-call activation pad + cast (weights are already prepared).
    xp = jnp.zeros((m_pad, d_pad), compute_dtype).at[:M, :model_dim].set(
        x2.astype(compute_dtype))

    grid = (m_pad // tm_eff, inter_pad // tk_eff)
    n_token_tiles = grid[0]

    acc_in_out = jnp.dtype(out_dtype) == jnp.float32
    kernel = ffn_kernel_out_is_acc if acc_in_out else ffn_kernel_with_scratch
    scratch = [] if acc_in_out else [pltpu.VMEM((tm_eff, d_pad), jnp.float32)]

    comp_bytes = jnp.dtype(compute_dtype).itemsize
    out_bytes = jnp.dtype(out_dtype).itemsize
    flops = 2 * 2 * m_pad * d_pad * inter_pad
    # Weights are re-streamed once per token tile.
    bytes_accessed = (xp.size * comp_bytes
                      + n_token_tiles * (w1_t.size + w2_t.size) * comp_bytes
                      + n_token_tiles * (b1p.size + b2p.size) * 4
                      + m_pad * d_pad * out_bytes)

    out = pl.pallas_call(
        kernel,
        out_shape=jax.ShapeDtypeStruct((m_pad, d_pad), out_dtype),
        grid_spec=pltpu.PrefetchScalarGridSpec(
            num_scalar_prefetch=0,
            grid=grid,
            in_specs=[
                pl.BlockSpec((tm_eff, d_pad), lambda i, k: (i, 0)),   # x tile
                pl.BlockSpec((d_pad, tk_eff), lambda i, k: (0, k)),   # W1^T slab
                pl.BlockSpec((1, tk_eff), lambda i, k: (0, k)),       # b1 slab
                pl.BlockSpec((tk_eff, d_pad), lambda i, k: (k, 0)),   # W2^T slab
                pl.BlockSpec((1, d_pad), lambda i, k: (0, 0)),        # b2 (const)
            ],
            out_specs=pl.BlockSpec((tm_eff, d_pad), lambda i, k: (i, 0)),
            scratch_shapes=scratch,
        ),
        compiler_params=pltpu.CompilerParams(
            dimension_semantics=("parallel", "arbitrary"),
            vmem_limit_bytes=vmem_limit_bytes,
        ),
        cost_estimate=pl.CostEstimate(
            flops=flops,
            transcendentals=m_pad * inter_pad,
            bytes_accessed=bytes_accessed,
        ),
    )(xp, w1_t, b1p, w2_t, b2p)

    return out[:M, :model_dim].reshape(orig_shape)


if __name__ == "__main__":
    batch, seq = 2, 8
    model_dim, intermediate_dim = 32, 64

    key = jax.random.PRNGKey(0)
    kx, kw1, kb1, kw2, kb2 = jax.random.split(key, 5)

    x = jax.random.normal(kx, (batch, seq, model_dim), dtype=jnp.float32)
    # PyTorch nn.Linear parameter shapes: weight (out, in), bias (out,)
    w1 = jax.random.normal(kw1, (intermediate_dim, model_dim), jnp.float32) * 0.05
    b1 = jax.random.normal(kb1, (intermediate_dim,), jnp.float32) * 0.05
    w2 = jax.random.normal(kw2, (model_dim, intermediate_dim), jnp.float32) * 0.05
    b2 = jax.random.normal(kb2, (model_dim,), jnp.float32) * 0.05

    # Prepare (transpose + pad + bf16 cast) the weights ONCE, outside the
    # per-call hot path.
    params = prepare_ffn_params(w1, b1, w2, b2)
    params = jax.block_until_ready(params)

    ffn = jax.jit(feed_forward)
    out = ffn(x, params)
    jax.block_until_ready(out)

    # Reference in plain f32 JAX (exact erf GELU, matching nn.GELU default).
    # bf16 matmul inputs (f32 accumulation) relax the tolerance slightly.
    h_ref = x @ w1.T + b1
    h_ref = 0.5 * h_ref * (1.0 + lax.erf(h_ref / jnp.sqrt(2.0)))
    y_ref = h_ref @ w2.T + b2

    assert out.shape == y_ref.shape, (out.shape, y_ref.shape)
    max_err = jnp.max(jnp.abs(out - y_ref))
    assert jnp.allclose(out, y_ref, atol=2e-2, rtol=2e-2), (
        f"mismatch vs reference: max abs err {max_err:.3e}")

    print("KERNEL_OK")
</pallas_src>

<mosaic_0001>
module attributes {stable_mosaic.version = 11 : i64} {
  func.func @ffn_kernel_out_is_acc(%arg0: i32, %arg1: i32, %arg2: memref<16x256xbf16, #tpu.memory_space<vmem>>, %arg3: memref<256x256xbf16, #tpu.memory_space<vmem>>, %arg4: memref<1x256xf32, #tpu.memory_space<vmem>>, %arg5: memref<256x256xbf16, #tpu.memory_space<vmem>>, %arg6: memref<1x256xf32, #tpu.memory_space<vmem>>, %arg7: memref<16x256xf32, #tpu.memory_space<vmem>>) attributes {dimension_semantics = [#tpu.dimension_semantics<parallel>, #tpu.dimension_semantics<arbitrary>], iteration_bounds = array<i64: 1, 1>, scalar_prefetch = 0 : i64, scratch_operands = 0 : i64, tpu.core_type = #tpu.core_type<tc>, window_params = [{transform_indices = @transform_0, window_bounds = array<i64: 16, 256>}, {transform_indices = @transform_1, window_bounds = array<i64: 256, 256>}, {transform_indices = @transform_2, window_bounds = array<i64: 1, 256>}, {transform_indices = @transform_3, window_bounds = array<i64: 256, 256>}, {pipeline_mode = #tpu.pipeline_mode<synchronous>, transform_indices = @transform_4, window_bounds = array<i64: 1, 256>}, {transform_indices = @transform_5, window_bounds = array<i64: 16, 256>}]} {
    %c0_i32 = arith.constant 0 : i32
    %0 = arith.cmpi eq, %arg1, %c0_i32 : i32
    %1 = arith.extui %0 : i1 to i32
    %c0_i32_0 = arith.constant 0 : i32
    %2 = arith.cmpi ne, %1, %c0_i32_0 : i32
    scf.if %2 {
      %c0_16 = arith.constant 0 : index
      %c0_17 = arith.constant 0 : index
      %23 = vector.load %arg6[%c0_16, %c0_17] : memref<1x256xf32, #tpu.memory_space<vmem>>, vector<1x256xf32>
      %24 = vector.shape_cast %23 : vector<1x256xf32> to vector<1x256xf32>
      %25 = vector.broadcast %24 : vector<1x256xf32> to vector<16x256xf32>
      %c0_18 = arith.constant 0 : index
      %c0_19 = arith.constant 0 : index
      %26 = vector.load %arg7[%c0_18, %c0_19] : memref<16x256xf32, #tpu.memory_space<vmem>>, vector<16x256xf32>
      tpu.vector_store %arg7[%c0_18, %c0_19], %25 {strides = array<i32>} : memref<16x256xf32, #tpu.memory_space<vmem>>, vector<16x256xf32>,
    } else {
    }
    %c0 = arith.constant 0 : index
    %c0_1 = arith.constant 0 : index
    %3 = vector.load %arg2[%c0, %c0_1] : memref<16x256xbf16, #tpu.memory_space<vmem>>, vector<16x256xbf16>
    %c0_2 = arith.constant 0 : index
    %c0_3 = arith.constant 0 : index
    %4 = vector.load %arg3[%c0_2, %c0_3] : memref<256x256xbf16, #tpu.memory_space<vmem>>, vector<256x256xbf16>
    %cst = arith.constant dense<0.000000e+00> : vector<16x256xf32>
    %5 = tpu.matmul %3, %4, %cst {dimension_numbers = #tpu.dot_dimension_numbers<[1], [0], [0], [1], [0, 0, 1, 1], [], []>} : vector<16x256xbf16>, vector<256x256xbf16>, vector<16x256xf32> -> vector<16x256xf32>
    %c0_4 = arith.constant 0 : index
    %c0_5 = arith.constant 0 : index
    %6 = vector.load %arg4[%c0_4, %c0_5] : memref<1x256xf32, #tpu.memory_space<vmem>>, vector<1x256xf32>
    %7 = vector.broadcast %6 : vector<1x256xf32> to vector<16x256xf32>
    %8 = arith.addf %5, %7 : vector<16x256xf32>
    %cst_6 = arith.constant 5.000000e-01 : f32
    %9 = vector.broadcast %cst_6 : f32 to vector<16x256xf32>
    %10 = arith.mulf %9, %8 : vector<16x256xf32>
    %cst_7 = arith.constant 0.707106769 : f32
    %11 = vector.broadcast %cst_7 : f32 to vector<16x256xf32>
    %12 = arith.mulf %8, %11 : vector<16x256xf32>
    %13 = math.erf %12 : vector<16x256xf32>
    %cst_8 = arith.constant 1.000000e+00 : f32
    %14 = vector.broadcast %cst_8 : f32 to vector<16x256xf32>
    %15 = arith.addf %14, %13 : vector<16x256xf32>
    %16 = arith.mulf %10, %15 : vector<16x256xf32>
    %c0_9 = arith.constant 0 : index
    %c0_10 = arith.constant 0 : index
    %17 = vector.load %arg7[%c0_9, %c0_10] : memref<16x256xf32, #tpu.memory_space<vmem>>, vector<16x256xf32>
    %18 = arith.truncf %16 : vector<16x256xf32> to vector<16x256xbf16>
    %c0_11 = arith.constant 0 : index
    %c0_12 = arith.constant 0 : index
    %19 = vector.load %arg5[%c0_11, %c0_12] : memref<256x256xbf16, #tpu.memory_space<vmem>>, vector<256x256xbf16>
    %cst_13 = arith.constant dense<0.000000e+00> : vector<16x256xf32>
    %20 = tpu.matmul %18, %19, %cst_13 {dimension_numbers = #tpu.dot_dimension_numbers<[1], [0], [0], [1], [0, 0, 1, 1], [], []>} : vector<16x256xbf16>, vector<256x256xbf16>, vector<16x256xf32> -> vector<16x256xf32>
    %21 = arith.addf %17, %20 : vector<16x256xf32>
    %c0_14 = arith.constant 0 : index
    %c0_15 = arith.constant 0 : index
    %22 = vector.load %arg7[%c0_14, %c0_15] : memref<16x256xf32, #tpu.memory_space<vmem>>, vector<16x256xf32>
    tpu.vector_store %arg7[%c0_14, %c0_15], %21 {strides = array<i32>} : memref<16x256xf32, #tpu.memory_space<vmem>>, vector<16x256xf32>,
    return
  }
  func.func @transform_0(%arg0: i32, %arg1: i32) -> (i32, i32) {
    %c0_i32 = arith.constant 0 : i32
    %c0_i32_0 = arith.constant 0 : i32
    return %arg0, %c0_i32 : i32, i32
  }
  func.func @transform_1(%arg0: i32, %arg1: i32) -> (i32, i32) {
    %c0_i32 = arith.constant 0 : i32
    %c0_i32_0 = arith.constant 0 : i32
    return %c0_i32, %arg1 : i32, i32
  }
  func.func @transform_2(%arg0: i32, %arg1: i32) -> (i32, i32) {
    %c0_i32 = arith.constant 0 : i32
    %c0_i32_0 = arith.constant 0 : i32
    return %c0_i32, %arg1 : i32, i32
  }
  func.func @transform_3(%arg0: i32, %arg1: i32) -> (i32, i32) {
    %c0_i32 = arith.constant 0 : i32
    %c0_i32_0 = arith.constant 0 : i32
    return %arg1, %c0_i32 : i32, i32
  }
  func.func @transform_4(%arg0: i32, %arg1: i32) -> (i32, i32) {
    %c0_i32 = arith.constant 0 : i32
    %c0_i32_0 = arith.constant 0 : i32
    %c0_i32_1 = arith.constant 0 : i32
    return %c0_i32, %c0_i32_0 : i32, i32
  }
  func.func @transform_5(%arg0: i32, %arg1: i32) -> (i32, i32) {
    %c0_i32 = arith.constant 0 : i32
    %c0_i32_0 = arith.constant 0 : i32
    return %arg0, %c0_i32 : i32, i32
  }
}

</mosaic_0001>

<llo_original>
// kernel: feed_forward.1
$region0: #{feed_forward.1}
  #allocation0 [shape = 'u32[]', space=smem, size = 0x4, offset = 0x4, fixed_abs, tag = 'smem constant byte address 0x4 - core index']
  #allocation1 [shape = 'u32[144,128]{1,0:T(1,128)}', space=vmem, size = 0x12000, scoped, tag = 'internal scratch']
  %s0 = inlined_call_operand.vmem [shape: bf16[16,256], index: 0, kind: input, shape index: {}]
  %s1 = inlined_call_operand.hbm [shape: bf16[256,256], index: 1, kind: input, shape index: {}]
  %s2 = inlined_call_operand.vmem [shape: f32[1,256], index: 2, kind: input, shape index: {}]
  %s3 = inlined_call_operand.hbm [shape: bf16[256,256], index: 3, kind: input, shape index: {}]
  %s4 = inlined_call_operand.vmem [shape: f32[1,256], index: 4, kind: input, shape index: {}]
  %s5 = inlined_call_operand.vmem [shape: f32[16,256], index: 5, kind: output, shape index: {}]
  %s6 = sld [smem:[#allocation0]]
  $region42: #{feed_forward.1} parent=0
    _
  %s8 = ssub.s32 1, %s6
  %s9 = scalar_select 0, %s8, %s6
  $region1: #{feed_forward.1} parent=0
    #allocation2 [shape = 'u8[131072]{0}', space=vmem, size = 0x20000, scoped, tag = 'input window, operand 1, single buffered']
    #allocation3 [shape = 's32[1]{0}', space=sflag, size = 0x4, scoped, tag = 'scoped memory for feed_forward.1']
    #allocation4 [shape = 'u8[131072]{0}', space=vmem, size = 0x20000, scoped, tag = 'input window, operand 3, single buffered']
    #allocation5 [shape = 's32[1]{0}', space=sflag, size = 0x4, scoped, tag = 'scoped memory for feed_forward.1']
    %10 = vsyncpa [#allocation3], 0
    %11 = vsyncpa [#allocation5], 0
    // Predicated region
    $region2: #{feed_forward.1} parent=1 // pred_check
      _
    $region3: #{feed_forward.1} parent=1 // pred_check_branch
      %13 = sbr.rel (0) target = $region5
    $region4: #{feed_forward.1} parent=1 // pred_region
      _
    $region5: #{feed_forward.1} parent=1 // pred_fallthru
      _
    // Predicated region
    $region6: #{feed_forward.1} parent=1 // pred_check
      _
    $region7: #{feed_forward.1} parent=1 // pred_check_branch
      %15 = sbr.rel (0) target = $region9
    $region8: #{feed_forward.1} parent=1 // pred_region
      %s17 = ssub.s32 4096, 4096
      %18 = vsyncadd [#allocation3], %s17
      %s19 = sshll.u32 [#allocation2], 4
      %s20 = int_to_ptr.vmem [resolvable:$true] %s19
      %25 = dma.hbm_to_vmem [thread:$0]  %s1, 4096, %s20, [#allocation3], 128, 128, 8
    $region9: #{feed_forward.1} parent=1 // pred_fallthru
      _
    // Predicated region
    $region10: #{feed_forward.1} parent=1 // pred_check
      _
    $region11: #{feed_forward.1} parent=1 // pred_check_branch
      %27 = sbr.rel (0) target = $region13
    $region12: #{feed_forward.1} parent=1 // pred_region
      _
    $region13: #{feed_forward.1} parent=1 // pred_fallthru
      _
    // Predicated region
    $region14: #{feed_forward.1} parent=1 // pred_check
      _
    $region15: #{feed_forward.1} parent=1 // pred_check_branch
      %29 = sbr.rel (0) target = $region17
    $region16: #{feed_forward.1} parent=1 // pred_region
      %s31 = ssub.s32 4096, 4096
      %32 = vsyncadd [#allocation5], %s31
      %s33 = sshll.u32 [#allocation4], 4
      %s34 = int_to_ptr.vmem [resolvable:$true] %s33
      %39 = dma.hbm_to_vmem [thread:$0]  %s3, 4096, %s34, [#allocation5], 128, 128, 8
    $region17: #{feed_forward.1} parent=1 // pred_fallthru
      _
    // Predicated region
    $region18: #{feed_forward.1} parent=1 // pred_check
      _
    $region19: #{feed_forward.1} parent=1 // pred_check_branch
      %41 = sbr.rel (0) target = $region21
    $region20: #{feed_forward.1} parent=1 // pred_region
      _
    $region21: #{feed_forward.1} parent=1 // pred_fallthru
      _
    // Predicated region
    $region22: #{feed_forward.1} parent=1 // pred_check
      _
    $region23: #{feed_forward.1} parent=1 // pred_check_branch
      %43 = sbr.rel (0) target = $region25
    $region24: #{feed_forward.1} parent=1 // pred_region
      %44 = dma.done [#allocation3], 4096
    $region25: #{feed_forward.1} parent=1 // pred_fallthru
      _
    // Predicated region
    $region26: #{feed_forward.1} parent=1 // pred_check
      _
    $region27: #{feed_forward.1} parent=1 // pred_check_branch
      %46 = sbr.rel (0) target = $region29
    $region28: #{feed_forward.1} parent=1 // pred_region
      %47 = dma.done [#allocation5], 4096
    $region29: #{feed_forward.1} parent=1 // pred_fallthru
      _
    %p48 = scmp.eq.s32.totalorder 0, 0
    // Predicated region
    $region30: #{feed_forward.1} parent=1 // pred_check
      %p49 = pneg %p48
    $region31: #{feed_forward.1} parent=1 // pred_check_branch
      %51 = sbr.rel (%p49) target = $region33
    $region32: #{feed_forward.1} parent=1 // pred_region
      %v52 = vld [vmem:[%s4] sm:$0x3]
      %v54 = vlaneseq
      %v55 = vshrl.u32 %v54, 7
      %v56 = vsub.s32 0, %v55
      %v57 = vrot.slane %v52, %v56
      %v58 = vlaneseq
      %v59 = vshrl.u32 %v58, 7
      %v60 = vsub.s32 1, %v59
      %v61 = vrot.slane %v52, %v60
      %64 = vst [vmem:[%s5] sm:$0xff] %v57
      %65 = vst [vmem:[%s5 + $0x8] sm:$0xff] %v61
      %66 = vst [vmem:[%s5 + $0x10] sm:$0xff] %v57
      %67 = vst [vmem:[%s5 + $0x18] sm:$0xff] %v61
    $region33: #{feed_forward.1} parent=1 // pred_fallthru
      _
    %v68 = vld [vmem:[%s0] sm:$0xff]
    %v69 = vld [vmem:[%s0 + $0x8] sm:$0xff]
    %v70 = vld [vmem:[#allocation2] sm:$0xff]
    %v71 = vld [vmem:[#allocation2 + $0x8] sm:$0xff]
    %v72 = vld [vmem:[#allocation2 + $0x10] sm:$0xff]
    %v73 = vld [vmem:[#allocation2 + $0x18] sm:$0xff]
    %v74 = vld [vmem:[#allocation2 + $0x20] sm:$0xff]
    %v75 = vld [vmem:[#allocation2 + $0x28] sm:$0xff]
    %v76 = vld [vmem:[#allocation2 + $0x30] sm:$0xff]
    %v77 = vld [vmem:[#allocation2 + $0x38] sm:$0xff]
    %v78 = vld [vmem:[#allocation2 + $0x40] sm:$0xff]
    %v79 = vld [vmem:[#allocation2 + $0x48] sm:$0xff]
    %v80 = vld [vmem:[#allocation2 + $0x50] sm:$0xff]
    %v81 = vld [vmem:[#allocation2 + $0x58] sm:$0xff]
    %v82 = vld [vmem:[#allocation2 + $0x60] sm:$0xff]
    %v83 = vld [vmem:[#allocation2 + $0x68] sm:$0xff]
    %v84 = vld [vmem:[#allocation2 + $0x70] sm:$0xff]
    %v85 = vld [vmem:[#allocation2 + $0x78] sm:$0xff]
    %v86 = vld [vmem:[#allocation2 + $0x80] sm:$0xff]
    %v87 = vld [vmem:[#allocation2 + $0x88] sm:$0xff]
    %v88 = vld [vmem:[#allocation2 + $0x90] sm:$0xff]
    %v89 = vld [vmem:[#allocation2 + $0x98] sm:$0xff]
    %v90 = vld [vmem:[#allocation2 + $0xa0] sm:$0xff]
    %v91 = vld [vmem:[#allocation2 + $0xa8] sm:$0xff]
    %v92 = vld [vmem:[#allocation2 + $0xb0] sm:$0xff]
    %v93 = vld [vmem:[#allocation2 + $0xb8] sm:$0xff]
    %v94 = vld [vmem:[#allocation2 + $0xc0] sm:$0xff]
    %v95 = vld [vmem:[#allocation2 + $0xc8] sm:$0xff]
    %v96 = vld [vmem:[#allocation2 + $0xd0] sm:$0xff]
    %v97 = vld [vmem:[#allocation2 + $0xd8] sm:$0xff]
    %v98 = vld [vmem:[#allocation2 + $0xe0] sm:$0xff]
    %v99 = vld [vmem:[#allocation2 + $0xe8] sm:$0xff]
    %v100 = vld [vmem:[#allocation2 + $0xf0] sm:$0xff]
    %v101 = vld [vmem:[#allocation2 + $0xf8] sm:$0xff]
    %v102 = vld [vmem:[%s2] sm:$0x3]
    %v104 = vlaneseq
    %v105 = vshrl.u32 %v104, 7
    %v106 = vsub.s32 0, %v105
    %v107 = vrot.slane %v102, %v106
    %v108 = vlaneseq
    %v109 = vshrl.u32 %v108, 7
    %v110 = vsub.s32 1, %v109
    %v111 = vrot.slane %v102, %v110
    %v116 = vunpack.c.l.b16 %v68
    %v117 = vunpack.c.h.b16 %v68
    %v118 = vunpack.c.l.b16 %v69
    %v119 = vunpack.c.h.b16 %v69
    %v120 = vpack.c.b16 %v118, %v116
    %v121 = vpack.c.b16 %v119, %v117
    %v156 = vunpack.c.l.b16 %v70
    %v157 = vunpack.c.h.b16 %v70
    %v158 = vunpack.c.l.b16 %v71
    %v159 = vunpack.c.h.b16 %v71
    %v160 = vunpack.c.l.b16 %v72
    %v161 = vunpack.c.h.b16 %v72
    %v162 = vunpack.c.l.b16 %v73
    %v163 = vunpack.c.h.b16 %v73
    %v164 = vunpack.c.l.b16 %v74
    %v165 = vunpack.c.h.b16 %v74
    %v166 = vunpack.c.l.b16 %v75
    %v167 = vunpack.c.h.b16 %v75
    %v168 = vunpack.c.l.b16 %v76
    %v169 = vunpack.c.h.b16 %v76
    %v170 = vunpack.c.l.b16 %v77
    %v171 = vunpack.c.h.b16 %v77
    %v172 = vunpack.c.l.b16 %v78
    %v173 = vunpack.c.h.b16 %v78
    %v174 = vunpack.c.l.b16 %v79
    %v175 = vunpack.c.h.b16 %v79
    %v176 = vunpack.c.l.b16 %v80
    %v177 = vunpack.c.h.b16 %v80
    %v178 = vunpack.c.l.b16 %v81
    %v179 = vunpack.c.h.b16 %v81
    %v180 = vunpack.c.l.b16 %v82
    %v181 = vunpack.c.h.b16 %v82
    %v182 = vunpack.c.l.b16 %v83
    %v183 = vunpack.c.h.b16 %v83
    %v184 = vunpack.c.l.b16 %v84
    %v185 = vunpack.c.h.b16 %v84
    %v186 = vunpack.c.l.b16 %v85
    %v187 = vunpack.c.h.b16 %v85
    %v188 = vunpack.c.l.b16 %v86
    %v189 = vunpack.c.h.b16 %v86
    %v190 = vunpack.c.l.b16 %v87
    %v191 = vunpack.c.h.b16 %v87
    %v192 = vunpack.c.l.b16 %v88
    %v193 = vunpack.c.h.b16 %v88
    %v194 = vunpack.c.l.b16 %v89
    %v195 = vunpack.c.h.b16 %v89
    %v196 = vunpack.c.l.b16 %v90
    %v197 = vunpack.c.h.b16 %v90
    %v198 = vunpack.c.l.b16 %v91
    %v199 = vunpack.c.h.b16 %v91
    %v200 = vunpack.c.l.b16 %v92
    %v201 = vunpack.c.h.b16 %v92
    %v202 = vunpack.c.l.b16 %v93
    %v203 = vunpack.c.h.b16 %v93
    %v204 = vunpack.c.l.b16 %v94
    %v205 = vunpack.c.h.b16 %v94
    %v206 = vunpack.c.l.b16 %v95
    %v207 = vunpack.c.h.b16 %v95
    %v208 = vunpack.c.l.b16 %v96
    %v209 = vunpack.c.h.b16 %v96
    %v210 = vunpack.c.l.b16 %v97
    %v211 = vunpack.c.h.b16 %v97
    %v212 = vunpack.c.l.b16 %v98
    %v213 = vunpack.c.h.b16 %v98
    %v214 = vunpack.c.l.b16 %v99
    %v215 = vunpack.c.h.b16 %v99
    %v216 = vunpack.c.l.b16 %v100
    %v217 = vunpack.c.h.b16 %v100
    %v218 = vunpack.c.l.b16 %v101
    %v219 = vunpack.c.h.b16 %v101
    %v220 = vpack.c.b16 %v158, %v156
    %v221 = vpack.c.b16 %v159, %v157
    %v222 = vpack.c.b16 %v162, %v160
    %v223 = vpack.c.b16 %v163, %v161
    %v224 = vpack.c.b16 %v166, %v164
    %v225 = vpack.c.b16 %v167, %v165
    %v226 = vpack.c.b16 %v170, %v168
    %v227 = vpack.c.b16 %v171, %v169
    %v228 = vpack.c.b16 %v174, %v172
    %v229 = vpack.c.b16 %v175, %v173
    %v230 = vpack.c.b16 %v178, %v176
    %v231 = vpack.c.b16 %v179, %v177
    %v232 = vpack.c.b16 %v182, %v180
    %v233 = vpack.c.b16 %v183, %v181
    %v234 = vpack.c.b16 %v186, %v184
    %v235 = vpack.c.b16 %v187, %v185
    %v236 = vpack.c.b16 %v190, %v188
    %v237 = vpack.c.b16 %v191, %v189
    %v238 = vpack.c.b16 %v194, %v192
    %v239 = vpack.c.b16 %v195, %v193
    %v240 = vpack.c.b16 %v198, %v196
    %v241 = vpack.c.b16 %v199, %v197
    %v242 = vpack.c.b16 %v202, %v200
    %v243 = vpack.c.b16 %v203, %v201
    %v244 = vpack.c.b16 %v206, %v204
    %v245 = vpack.c.b16 %v207, %v205
    %v246 = vpack.c.b16 %v210, %v208
    %v247 = vpack.c.b16 %v211, %v209
    %v248 = vpack.c.b16 %v214, %v212
    %v249 = vpack.c.b16 %v215, %v213
    %v250 = vpack.c.b16 %v218, %v216
    %v251 = vpack.c.b16 %v219, %v217
    %284 = vmatprep.subr.bf16.mxu0 %v235
    %285 = vmatpush1.bf16.msra.mxu0 %v234
    %286 = vmatprep.subr.bf16.mxu0 %v233
    %287 = vmatpush1.bf16.msra.mxu0 %v232
    %288 = vmatprep.subr.bf16.mxu0 %v231
    %289 = vmatpush1.bf16.msra.mxu0 %v230
    %290 = vmatprep.subr.bf16.mxu0 %v229
    %291 = vmatpush1.bf16.msra.mxu0 %v228
    %292 = vmatprep.subr.bf16.mxu0 %v227
    %293 = vmatpush1.bf16.msra.mxu0 %v226
    %294 = vmatprep.subr.bf16.mxu0 %v225
    %295 = vmatpush1.bf16.msra.mxu0 %v224
    %296 = vmatprep.subr.bf16.mxu0 %v223
    %297 = vmatpush1.bf16.msra.mxu0 %v222
    %298 = vmatprep.subr.bf16.mxu0 %v221
    %299 = vmatpush1.bf16.msra.mxu0 %v220
    %300 = vmatprep.subr.bf16.mxu0 %v251
    %301 = vmatpush2.bf16.msra.mxu0 %v250
    %302 = vmatprep.subr.bf16.mxu0 %v249
    %303 = vmatpush2.bf16.msra.mxu0 %v248
    %304 = vmatprep.subr.bf16.mxu0 %v247
    %305 = vmatpush2.bf16.msra.mxu0 %v246
    %306 = vmatprep.subr.bf16.mxu0 %v245
    %307 = vmatpush2.bf16.msra.mxu0 %v244
    %308 = vmatprep.subr.bf16.mxu0 %v243
    %309 = vmatpush2.bf16.msra.mxu0 %v242
    %310 = vmatprep.subr.bf16.mxu0 %v241
    %311 = vmatpush2.bf16.msra.mxu0 %v240
    %312 = vmatprep.subr.bf16.mxu0 %v239
    %313 = vmatpush2.bf16.msra.mxu0 %v238
    %314 = vmatprep.subr.bf16.mxu0 %v237
    %315 = vmatpush2.bf16.msra.mxu0 %v236
    %316 = vmatprep.mubr.bf16.mxu0 %v121
    %317 = vmatmul.mubr.bf16.gmra.mxu0 %v120
    %v318 = vpop.f32.mrf.mxu0
    %v319 = vadd.f32 %v107, %v318
    %v320 = vpop.f32.mrf.mxu0
    %v321 = vadd.f32 %v111, %v320
    %v322 = vpop.f32.mrf.mxu0
    %v323 = vadd.f32 %v107, %v322
    %v324 = vpop.f32.mrf.mxu0
    %v325 = vadd.f32 %v111, %v324
    %326 = vdwg.mxu0
    %v327 = vmul.f32 %v319, 0.5
    %v328 = vmul.f32 %v321, 0.5
    %v329 = vmul.f32 %v323, 0.5
    %v330 = vmul.f32 %v325, 0.5
    %v331 = vmul.f32 %v319, 0.70710677
    %v332 = vmul.f32 %v321, 0.70710677
    %v333 = vmul.f32 %v323, 0.70710677
    %v334 = vmul.f32 %v325, 0.70710677
    %v335 = verf.f32.pop %v331
    %v336 = verf.f32.pop %v332
    %v337 = verf.f32.pop %v333
    %v338 = verf.f32.pop %v334
    %v339 = vadd.f32 %v335, 1.0
    %v340 = vadd.f32 %v336, 1.0
    %v341 = vadd.f32 %v337, 1.0
    %v342 = vadd.f32 %v338, 1.0
    %v343 = vmul.f32 %v327, %v339
    %v344 = vmul.f32 %v328, %v340
    %v345 = vmul.f32 %v329, %v341
    %v346 = vmul.f32 %v330, %v342
    %v347 = vld [vmem:[%s5] sm:$0xff]
    %v348 = vld [vmem:[%s5 + $0x8] sm:$0xff]
    %v349 = vld [vmem:[%s5 + $0x10] sm:$0xff]
    %v350 = vld [vmem:[%s5 + $0x18] sm:$0xff]
    %v351 = vpack.c.bf16 %v345, %v343
    %v352 = vpack.c.bf16 %v346, %v344
    %v353 = vld [vmem:[#allocation4] sm:$0xff]
    %v354 = vld [vmem:[#allocation4 + $0x8] sm:$0xff]
    %v355 = vld [vmem:[#allocation4 + $0x10] sm:$0xff]
    %v356 = vld [vmem:[#allocation4 + $0x18] sm:$0xff]
    %v357 = vld [vmem:[#allocation4 + $0x20] sm:$0xff]
    %v358 = vld [vmem:[#allocation4 + $0x28] sm:$0xff]
    %v359 = vld [vmem:[#allocation4 + $0x30] sm:$0xff]
    %v360 = vld [vmem:[#allocation4 + $0x38] sm:$0xff]
    %v361 = vld [vmem:[#allocation4 + $0x40] sm:$0xff]
    %v362 = vld [vmem:[#allocation4 + $0x48] sm:$0xff]
    %v363 = vld [vmem:[#allocation4 + $0x50] sm:$0xff]
    %v364 = vld [vmem:[#allocation4 + $0x58] sm:$0xff]
    %v365 = vld [vmem:[#allocation4 + $0x60] sm:$0xff]
    %v366 = vld [vmem:[#allocation4 + $0x68] sm:$0xff]
    %v367 = vld [vmem:[#allocation4 + $0x70] sm:$0xff]
    %v368 = vld [vmem:[#allocation4 + $0x78] sm:$0xff]
    %v369 = vld [vmem:[#allocation4 + $0x80] sm:$0xff]
    %v370 = vld [vmem:[#allocation4 + $0x88] sm:$0xff]
    %v371 = vld [vmem:[#allocation4 + $0x90] sm:$0xff]
    %v372 = vld [vmem:[#allocation4 + $0x98] sm:$0xff]
    %v373 = vld [vmem:[#allocation4 + $0xa0] sm:$0xff]
    %v374 = vld [vmem:[#allocation4 + $0xa8] sm:$0xff]
    %v375 = vld [vmem:[#allocation4 + $0xb0] sm:$0xff]
    %v376 = vld [vmem:[#allocation4 + $0xb8] sm:$0xff]
    %v377 = vld [vmem:[#allocation4 + $0xc0] sm:$0xff]
    %v378 = vld [vmem:[#allocation4 + $0xc8] sm:$0xff]
    %v379 = vld [vmem:[#allocation4 + $0xd0] sm:$0xff]
    %v380 = vld [vmem:[#allocation4 + $0xd8] sm:$0xff]
    %v381 = vld [vmem:[#allocation4 + $0xe0] sm:$0xff]
    %v382 = vld [vmem:[#allocation4 + $0xe8] sm:$0xff]
    %v383 = vld [vmem:[#allocation4 + $0xf0] sm:$0xff]
    %v384 = vld [vmem:[#allocation4 + $0xf8] sm:$0xff]
    %v417 = vunpack.c.l.b16 %v353
    %v418 = vunpack.c.h.b16 %v353
    %v419 = vunpack.c.l.b16 %v354
    %v420 = vunpack.c.h.b16 %v354
    %v421 = vunpack.c.l.b16 %v355
    %v422 = vunpack.c.h.b16 %v355
    %v423 = vunpack.c.l.b16 %v356
    %v424 = vunpack.c.h.b16 %v356
    %v425 = vunpack.c.l.b16 %v357
    %v426 = vunpack.c.h.b16 %v357
    %v427 = vunpack.c.l.b16 %v358
    %v428 = vunpack.c.h.b16 %v358
    %v429 = vunpack.c.l.b16 %v359
    %v430 = vunpack.c.h.b16 %v359
    %v431 = vunpack.c.l.b16 %v360
    %v432 = vunpack.c.h.b16 %v360
    %v433 = vunpack.c.l.b16 %v361
    %v434 = vunpack.c.h.b16 %v361
    %v435 = vunpack.c.l.b16 %v362
    %v436 = vunpack.c.h.b16 %v362
    %v437 = vunpack.c.l.b16 %v363
    %v438 = vunpack.c.h.b16 %v363
    %v439 = vunpack.c.l.b16 %v364
    %v440 = vunpack.c.h.b16 %v364
    %v441 = vunpack.c.l.b16 %v365
    %v442 = vunpack.c.h.b16 %v365
    %v443 = vunpack.c.l.b16 %v366
    %v444 = vunpack.c.h.b16 %v366
    %v445 = vunpack.c.l.b16 %v367
    %v446 = vunpack.c.h.b16 %v367
    %v447 = vunpack.c.l.b16 %v368
    %v448 = vunpack.c.h.b16 %v368
    %v449 = vunpack.c.l.b16 %v369
    %v450 = vunpack.c.h.b16 %v369
    %v451 = vunpack.c.l.b16 %v370
    %v452 = vunpack.c.h.b16 %v370
    %v453 = vunpack.c.l.b16 %v371
    %v454 = vunpack.c.h.b16 %v371
    %v455 = vunpack.c.l.b16 %v372
    %v456 = vunpack.c.h.b16 %v372
    %v457 = vunpack.c.l.b16 %v373
    %v458 = vunpack.c.h.b16 %v373
    %v459 = vunpack.c.l.b16 %v374
    %v460 = vunpack.c.h.b16 %v374
    %v461 = vunpack.c.l.b16 %v375
    %v462 = vunpack.c.h.b16 %v375
    %v463 = vunpack.c.l.b16 %v376
    %v464 = vunpack.c.h.b16 %v376
    %v465 = vunpack.c.l.b16 %v377
    %v466 = vunpack.c.h.b16 %v377
    %v467 = vunpack.c.l.b16 %v378
    %v468 = vunpack.c.h.b16 %v378
    %v469 = vunpack.c.l.b16 %v379
    %v470 = vunpack.c.h.b16 %v379
    %v471 = vunpack.c.l.b16 %v380
    %v472 = vunpack.c.h.b16 %v380
    %v473 = vunpack.c.l.b16 %v381
    %v474 = vunpack.c.h.b16 %v381
    %v475 = vunpack.c.l.b16 %v382
    %v476 = vunpack.c.h.b16 %v382
    %v477 = vunpack.c.l.b16 %v383
    %v478 = vunpack.c.h.b16 %v383
    %v479 = vunpack.c.l.b16 %v384
    %v480 = vunpack.c.h.b16 %v384
    %v481 = vpack.c.b16 %v419, %v417
    %v482 = vpack.c.b16 %v420, %v418
    %v483 = vpack.c.b16 %v423, %v421
    %v484 = vpack.c.b16 %v424, %v422
    %v485 = vpack.c.b16 %v427, %v425
    %v486 = vpack.c.b16 %v428, %v426
    %v487 = vpack.c.b16 %v431, %v429
    %v488 = vpack.c.b16 %v432, %v430
    %v489 = vpack.c.b16 %v435, %v433
    %v490 = vpack.c.b16 %v436, %v434
    %v491 = vpack.c.b16 %v439, %v437
    %v492 = vpack.c.b16 %v440, %v438
    %v493 = vpack.c.b16 %v443, %v441
    %v494 = vpack.c.b16 %v444, %v442
    %v495 = vpack.c.b16 %v447, %v445
    %v496 = vpack.c.b16 %v448, %v446
    %v497 = vpack.c.b16 %v451, %v449
    %v498 = vpack.c.b16 %v452, %v450
    %v499 = vpack.c.b16 %v455, %v453
    %v500 = vpack.c.b16 %v456, %v454
    %v501 = vpack.c.b16 %v459, %v457
    %v502 = vpack.c.b16 %v460, %v458
    %v503 = vpack.c.b16 %v463, %v461
    %v504 = vpack.c.b16 %v464, %v462
    %v505 = vpack.c.b16 %v467, %v465
    %v506 = vpack.c.b16 %v468, %v466
    %v507 = vpack.c.b16 %v471, %v469
    %v508 = vpack.c.b16 %v472, %v470
    %v509 = vpack.c.b16 %v475, %v473
    %v510 = vpack.c.b16 %v476, %v474
    %v511 = vpack.c.b16 %v479, %v477
    %v512 = vpack.c.b16 %v480, %v478
    %545 = vmatprep.subr.bf16.mxu0 %v496
    %546 = vmatpush1.bf16.msra.mxu0 %v495
    %547 = vmatprep.subr.bf16.mxu0 %v494
    %548 = vmatpush1.bf16.msra.mxu0 %v493
    %549 = vmatprep.subr.bf16.mxu0 %v492
    %550 = vmatpush1.bf16.msra.mxu0 %v491
    %551 = vmatprep.subr.bf16.mxu0 %v490
    %552 = vmatpush1.bf16.msra.mxu0 %v489
    %553 = vmatprep.subr.bf16.mxu0 %v488
    %554 = vmatpush1.bf16.msra.mxu0 %v487
    %555 = vmatprep.subr.bf16.mxu0 %v486
    %556 = vmatpush1.bf16.msra.mxu0 %v485
    %557 = vmatprep.subr.bf16.mxu0 %v484
    %558 = vmatpush1.bf16.msra.mxu0 %v483
    %559 = vmatprep.subr.bf16.mxu0 %v482
    %560 = vmatpush1.bf16.msra.mxu0 %v481
    %561 = vmatprep.subr.bf16.mxu0 %v512
    %562 = vmatpush2.bf16.msra.mxu0 %v511
    %563 = vmatprep.subr.bf16.mxu0 %v510
    %564 = vmatpush2.bf16.msra.mxu0 %v509
    %565 = vmatprep.subr.bf16.mxu0 %v508
    %566 = vmatpush2.bf16.msra.mxu0 %v507
    %567 = vmatprep.subr.bf16.mxu0 %v506
    %568 = vmatpush2.bf16.msra.mxu0 %v505
    %569 = vmatprep.subr.bf16.mxu0 %v504
    %570 = vmatpush2.bf16.msra.mxu0 %v503
    %571 = vmatprep.subr.bf16.mxu0 %v502
    %572 = vmatpush2.bf16.msra.mxu0 %v501
    %573 = vmatprep.subr.bf16.mxu0 %v500
    %574 = vmatpush2.bf16.msra.mxu0 %v499
    %575 = vmatprep.subr.bf16.mxu0 %v498
    %576 = vmatpush2.bf16.msra.mxu0 %v497
    %577 = vmatprep.mubr.bf16.mxu0 %v352
    %578 = vmatmul.mubr.bf16.gmra.mxu0 %v351
    %v579 = vpop.f32.mrf.mxu0
    %v580 = vadd.f32 0.0, %v579
    %v581 = vpop.f32.mrf.mxu0
    %v582 = vadd.f32 0.0, %v581
    %v583 = vpop.f32.mrf.mxu0
    %v584 = vadd.f32 0.0, %v583
    %v585 = vpop.f32.mrf.mxu0
    %v586 = vadd.f32 0.0, %v585
    %587 = vdwg.mxu0
    %v588 = vadd.f32 %v347, %v580
    %v589 = vadd.f32 %v348, %v582
    %v590 = vadd.f32 %v349, %v584
    %v591 = vadd.f32 %v350, %v586
    %592 = vst [vmem:[%s5] sm:$0xff] %v588
    %593 = vst [vmem:[%s5 + $0x8] sm:$0xff] %v589
    %594 = vst [vmem:[%s5 + $0x10] sm:$0xff] %v590
    %595 = vst [vmem:[%s5 + $0x18] sm:$0xff] %v591
    // Predicated region
    $region34: #{feed_forward.1} parent=1 // pred_check
      _
    $region35: #{feed_forward.1} parent=1 // pred_check_branch
      %597 = sbr.rel (0) target = $region37
    $region36: #{feed_forward.1} parent=1 // pred_region
      _
    $region37: #{feed_forward.1} parent=1 // pred_fallthru
      _
    // Predicated region
    $region38: #{feed_forward.1} parent=1 // pred_check
      _
    $region39: #{feed_forward.1} parent=1 // pred_check_branch
      %599 = sbr.rel (0) target = $region41
    $region40: #{feed_forward.1} parent=1 // pred_region
      _
    $region41: #{feed_forward.1} parent=1 // pred_fallthru
      _
    %600 = vsyncpa [#allocation3], 1
    %601 = vsyncpa [#allocation5], 1

</llo_original>
